<compile_context>
chip_gen: v5e
topology: v5e:2x2
jax: 0.10.0
libtpu: 0.0.40
codegen_flags: <defaults>
</compile_context>

<pallas_src>
import jax
import jax.numpy as jnp
from jax import lax
from jax.experimental import pallas as pl
from jax.experimental.pallas import tpu as pltpu

_LANE = 128
# bf16 tables up to this size are kept VMEM-resident and gathered in-kernel with
# a one-hot MXU matmul.  24 MiB leaves headroom on every generation (v7x: 64 MiB
# VMEM total / ~48 MiB comfortably usable; v5e/v6e: 128 MiB).
_RESIDENT_TABLE_BUDGET_BYTES = 24 * 1024 * 1024


def _round_up(x, m):
    return ((x + m - 1) // m) * m


def _mlp_layers(x_bf16, w1_ref, b1_ref, w2_ref, b2_ref, w3_ref, b3_ref,
                w4_ref, b4_ref, out_ref):
    """Shared MLP body, transposed layout: x_bf16 is (2D, TILE_B)."""
    f32, bf16 = jnp.float32, jnp.bfloat16
    # Layer 1: ReLU(W1 @ x + b1)                         -> (D, TB)
    h = jnp.dot(w1_ref[...], x_bf16, preferred_element_type=f32) + b1_ref[...]
    h = jnp.maximum(h, 0.0)
    # Layer 2: ReLU(W2 @ h + b2)                         -> (D//2, TB)
    h = jnp.dot(w2_ref[...], h.astype(bf16), preferred_element_type=f32) + b2_ref[...]
    h = jnp.maximum(h, 0.0)
    # Layer 3: W3 @ h + b3                               -> (D//4, TB)
    h = jnp.dot(w3_ref[...], h.astype(bf16), preferred_element_type=f32) + b3_ref[...]
    # fc_layer + sigmoid: W4 @ h + b4                    -> (1, TB), lane-dense store
    h = jnp.dot(w4_ref[...], h.astype(bf16), preferred_element_type=f32) + b4_ref[...]
    out_ref[...] = jax.nn.sigmoid(h)


def mlp_fused_gather_kernel(uid_ref, iid_ref, ut_ref, it_ref,
                            w1_ref, b1_ref, w2_ref, b2_ref,
                            w3_ref, b3_ref, w4_ref, b4_ref, out_ref):
    """Embedding gather fused in-kernel via one-hot MXU matmuls."""
    bf16 = jnp.bfloat16
    uid = uid_ref[...]                        # (1, TB) int32
    iid = iid_ref[...]                        # (1, TB) int32
    tb = uid.shape[1]
    nu = ut_ref.shape[1]
    ni = it_ref.shape[1]

    # One-hot "gather matrices": (num_users, TB) / (num_items, TB), bf16.
    oh_u = (lax.broadcasted_iota(jnp.int32, (nu, tb), 0) == uid).astype(bf16)
    oh_i = (lax.broadcasted_iota(jnp.int32, (ni, tb), 0) == iid).astype(bf16)

    # (D, num_users) @ (num_users, TB) -> (D, TB): transposed embedding slab.
    ue = jnp.dot(ut_ref[...], oh_u, preferred_element_type=jnp.float32)
    ie = jnp.dot(it_ref[...], oh_i, preferred_element_type=jnp.float32)
    x = jnp.concatenate([ue, ie], axis=0).astype(bf16)        # (2D, TB)

    _mlp_layers(x, w1_ref, b1_ref, w2_ref, b2_ref, w3_ref, b3_ref,
                w4_ref, b4_ref, out_ref)


def mlp_slab_kernel(ue_ref, ie_ref,
                    w1_ref, b1_ref, w2_ref, b2_ref,
                    w3_ref, b3_ref, w4_ref, b4_ref, out_ref):
    """Fallback path: pre-gathered (D, TILE_B) bf16 embedding slabs."""
    x = jnp.concatenate([ue_ref[...], ie_ref[...]], axis=0)   # (2D, TB) bf16
    _mlp_layers(x, w1_ref, b1_ref, w2_ref, b2_ref, w3_ref, b3_ref,
                w4_ref, b4_ref, out_ref)


def mlp_forward(uid, iid, params, *, tile_b_target=2048, force_slab_path=False):
    """Fused embedding-gather + MLP forward, tiled along the batch (lane) axis."""
    D = params["user_emb"].shape[1]
    num_users = params["user_emb"].shape[0]
    num_items = params["item_emb"].shape[0]
    B = uid.shape[0]
    f32, bf16 = jnp.float32, jnp.bfloat16

    # --- batch tiling: lane-aligned tiles; >=2 grid steps for B > 256 (v7x TCs) ---
    tile_b_target = _round_up(tile_b_target, _LANE)
    if B <= 2 * _LANE:
        tile_b = _round_up(B, _LANE)                              # single block
    else:
        tile_b = min(tile_b_target, _round_up(-(-B // 2), _LANE))  # >= 2 steps
    b_pad = _round_up(B, tile_b)
    grid = (b_pad // tile_b,)

    # Pad the (tiny) index vectors, never the gathered activation slabs.
    pad = b_pad - B
    uid_p = jnp.pad(uid.astype(jnp.int32), (0, pad)).reshape(1, b_pad)
    iid_p = jnp.pad(iid.astype(jnp.int32), (0, pad)).reshape(1, b_pad)

    # Weights in torch (out, in) layout; bf16 operands, f32 accumulation in-kernel.
    w1 = params["w1"].astype(bf16)                 # (D, 2D)
    w2 = params["w2"].astype(bf16)                 # (D//2, D)
    w3 = params["w3"].astype(bf16)                 # (D//4, D//2)
    w4 = params["w4"].astype(bf16)                 # (1, D//4)
    b1 = params["b1"].reshape(-1, 1).astype(f32)
    b2 = params["b2"].reshape(-1, 1).astype(f32)
    b3 = params["b3"].reshape(-1, 1).astype(f32)
    b4 = params["b4"].reshape(-1, 1).astype(f32)

    def resident(arr):
        # Full-array block, constant block index -> fetched once, VMEM-resident.
        return pl.BlockSpec(arr.shape, lambda i: (0, 0))

    idx_spec = pl.BlockSpec((1, tile_b), lambda i: (0, i))
    out_spec = pl.BlockSpec((1, tile_b), lambda i: (0, i))
    weight_args = (w1, b1, w2, b2, w3, b3, w4, b4)
    weight_specs = [resident(a) for a in weight_args]

    table_bytes = (num_users + num_items) * D * 2      # bf16 tables
    use_fused = (not force_slab_path) and table_bytes <= _RESIDENT_TABLE_BUDGET_BYTES

    if use_fused:
        # In a persistent model these bf16/transposed tables would be prepared
        # once outside the per-call path.
        ut = params["user_emb"].astype(bf16).T          # (D, num_users)
        it = params["item_emb"].astype(bf16).T          # (D, num_items)
        kernel = mlp_fused_gather_kernel
        inputs = (uid_p, iid_p, ut, it) + weight_args
        in_specs = [idx_spec, idx_spec, resident(ut), resident(it)] + weight_specs
    else:
        # TODO(synk): replace this XLA gather with a manual per-tile DMA gather
        # (make_async_copy, double-buffered scratch) for very large tables.
        ue_t = params["user_emb"].astype(bf16)[uid_p[0]].T    # (D, b_pad) bf16
        ie_t = params["item_emb"].astype(bf16)[iid_p[0]].T    # (D, b_pad) bf16
        act_spec = pl.BlockSpec((D, tile_b), lambda i: (0, i))
        kernel = mlp_slab_kernel
        inputs = (ue_t, ie_t) + weight_args
        in_specs = [act_spec, act_spec] + weight_specs

    out = pl.pallas_call(
        kernel,
        out_shape=jax.ShapeDtypeStruct((1, b_pad), f32),
        grid_spec=pltpu.PrefetchScalarGridSpec(
            num_scalar_prefetch=0,
            grid=grid,
            in_specs=in_specs,
            out_specs=out_spec,
        ),
        compiler_params=pltpu.CompilerParams(
            dimension_semantics=("parallel",),
            vmem_limit_bytes=32 * 1024 * 1024,
        ),
    )(*inputs)

    return out[0, :B].reshape(B, 1)


def init_params(key, num_users, num_items, latent_dim):
    """Deterministic init mimicking torch defaults; Linear weights stored (out, in)."""
    D = latent_dim
    ks = jax.random.split(key, 10)

    def lin(kw, kb, fan_in, fan_out):
        bound = 1.0 / (fan_in ** 0.5)
        w = jax.random.uniform(kw, (fan_out, fan_in), jnp.float32, -bound, bound)
        b = jax.random.uniform(kb, (fan_out,), jnp.float32, -bound, bound)
        return w, b

    params = {}
    params["user_emb"] = jax.random.normal(ks[0], (num_users, D), jnp.float32)
    params["item_emb"] = jax.random.normal(ks[1], (num_items, D), jnp.float32)
    params["w1"], params["b1"] = lin(ks[2], ks[3], 2 * D, D)
    params["w2"], params["b2"] = lin(ks[4], ks[5], D, D // 2)
    params["w3"], params["b3"] = lin(ks[6], ks[7], D // 2, D // 4)
    params["w4"], params["b4"] = lin(ks[8], ks[9], D // 4, 1)
    return params


def mlp_reference(uid, iid, params):
    """Pure-JAX (f32) reference matching the PyTorch module."""
    x = jnp.concatenate([params["user_emb"][uid], params["item_emb"][iid]], axis=1)
    h = jnp.maximum(x @ params["w1"].T + params["b1"], 0.0)
    h = jnp.maximum(h @ params["w2"].T + params["b2"], 0.0)
    h = h @ params["w3"].T + params["b3"]
    h = h @ params["w4"].T + params["b4"]
    return jax.nn.sigmoid(h)


if __name__ == "__main__":
    NUM_USERS, NUM_ITEMS, LATENT_DIM = 16, 16, 32

    key = jax.random.PRNGKey(0)
    kp, ku, ki, ku2, ki2 = jax.random.split(key, 5)
    params = init_params(kp, NUM_USERS, NUM_ITEMS, LATENT_DIM)

    # Small batch: single lane-aligned block (grid of 1), fused in-kernel gather.
    B1 = 8
    uid1 = jax.random.randint(ku, (B1,), 0, NUM_USERS, dtype=jnp.int32)
    iid1 = jax.random.randint(ki, (B1,), 0, NUM_ITEMS, dtype=jnp.int32)
    out1 = jax.block_until_ready(mlp_forward(uid1, iid1, params))
    ref1 = mlp_reference(uid1, iid1, params)
    assert out1.shape == (B1, 1)
    assert jnp.allclose(out1, ref1, atol=2e-2), float(jnp.max(jnp.abs(out1 - ref1)))

    # Larger batch: >=2 grid steps (v7x dual-TC friendly), fused gather.
    B2 = 320
    uid2 = jax.random.randint(ku2, (B2,), 0, NUM_USERS, dtype=jnp.int32)
    iid2 = jax.random.randint(ki2, (B2,), 0, NUM_ITEMS, dtype=jnp.int32)
    out2 = jax.block_until_ready(mlp_forward(uid2, iid2, params))
    ref2 = mlp_reference(uid2, iid2, params)
    assert out2.shape == (B2, 1)
    assert jnp.allclose(out2, ref2, atol=2e-2), float(jnp.max(jnp.abs(out2 - ref2)))

    # Same batch through the fallback (pre-gathered slab) path for coverage.
    out3 = jax.block_until_ready(
        mlp_forward(uid2, iid2, params, force_slab_path=True))
    assert out3.shape == (B2, 1)
    assert jnp.allclose(out3, ref2, atol=2e-2), float(jnp.max(jnp.abs(out3 - ref2)))

    print("KERNEL_OK")
</pallas_src>

<mosaic_0001>
module attributes {stable_mosaic.version = 11 : i64} {
  func.func @mlp_fused_gather_kernel(%arg0: i32, %arg1: memref<1x128xi32, #tpu.memory_space<vmem>>, %arg2: memref<1x128xi32, #tpu.memory_space<vmem>>, %arg3: memref<32x16xbf16, #tpu.memory_space<vmem>>, %arg4: memref<32x16xbf16, #tpu.memory_space<vmem>>, %arg5: memref<32x64xbf16, #tpu.memory_space<vmem>>, %arg6: memref<32x1xf32, #tpu.memory_space<vmem>>, %arg7: memref<16x32xbf16, #tpu.memory_space<vmem>>, %arg8: memref<16x1xf32, #tpu.memory_space<vmem>>, %arg9: memref<8x16xbf16, #tpu.memory_space<vmem>>, %arg10: memref<8x1xf32, #tpu.memory_space<vmem>>, %arg11: memref<1x8xbf16, #tpu.memory_space<vmem>>, %arg12: memref<1x1xf32, #tpu.memory_space<vmem>>, %arg13: memref<1x128xf32, #tpu.memory_space<vmem>>) attributes {dimension_semantics = [#tpu.dimension_semantics<parallel>], iteration_bounds = array<i64: 1>, scalar_prefetch = 0 : i64, scratch_operands = 0 : i64, tpu.core_type = #tpu.core_type<tc>, window_params = [{transform_indices = @transform_0, window_bounds = array<i64: 1, 128>}, {transform_indices = @transform_1, window_bounds = array<i64: 1, 128>}, {pipeline_mode = #tpu.pipeline_mode<synchronous>, transform_indices = @transform_2, window_bounds = array<i64: 32, 16>}, {pipeline_mode = #tpu.pipeline_mode<synchronous>, transform_indices = @transform_3, window_bounds = array<i64: 32, 16>}, {pipeline_mode = #tpu.pipeline_mode<synchronous>, transform_indices = @transform_4, window_bounds = array<i64: 32, 64>}, {pipeline_mode = #tpu.pipeline_mode<synchronous>, transform_indices = @transform_5, window_bounds = array<i64: 32, 1>}, {pipeline_mode = #tpu.pipeline_mode<synchronous>, transform_indices = @transform_6, window_bounds = array<i64: 16, 32>}, {pipeline_mode = #tpu.pipeline_mode<synchronous>, transform_indices = @transform_7, window_bounds = array<i64: 16, 1>}, {pipeline_mode = #tpu.pipeline_mode<synchronous>, transform_indices = @transform_8, window_bounds = array<i64: 8, 16>}, {pipeline_mode = #tpu.pipeline_mode<synchronous>, transform_indices = @transform_9, window_bounds = array<i64: 8, 1>}, {pipeline_mode = #tpu.pipeline_mode<synchronous>, transform_indices = @transform_10, window_bounds = array<i64: 1, 8>}, {pipeline_mode = #tpu.pipeline_mode<synchronous>, transform_indices = @transform_11, window_bounds = array<i64: 1, 1>}, {transform_indices = @transform_12, window_bounds = array<i64: 1, 128>}]} {
    %c0 = arith.constant 0 : index
    %c0_0 = arith.constant 0 : index
    %0 = vector.load %arg1[%c0, %c0_0] : memref<1x128xi32, #tpu.memory_space<vmem>>, vector<1x128xi32>
    %c0_1 = arith.constant 0 : index
    %c0_2 = arith.constant 0 : index
    %1 = vector.load %arg2[%c0_1, %c0_2] : memref<1x128xi32, #tpu.memory_space<vmem>>, vector<1x128xi32>
    %2 = tpu.iota {dimensions = array<i32: 0>} : vector<16x128xi32>
    %3 = vector.broadcast %0 : vector<1x128xi32> to vector<16x128xi32>
    %4 = arith.cmpi eq, %2, %3 : vector<16x128xi32>
    %5 = arith.extui %4 : vector<16x128xi1> to vector<16x128xi32>
    %6 = arith.sitofp %5 : vector<16x128xi32> to vector<16x128xf32>
    %7 = arith.truncf %6 : vector<16x128xf32> to vector<16x128xbf16>
    %8 = tpu.iota {dimensions = array<i32: 0>} : vector<16x128xi32>
    %9 = vector.broadcast %1 : vector<1x128xi32> to vector<16x128xi32>
    %10 = arith.cmpi eq, %8, %9 : vector<16x128xi32>
    %11 = arith.extui %10 : vector<16x128xi1> to vector<16x128xi32>
    %12 = arith.sitofp %11 : vector<16x128xi32> to vector<16x128xf32>
    %13 = arith.truncf %12 : vector<16x128xf32> to vector<16x128xbf16>
    %c0_3 = arith.constant 0 : index
    %c0_4 = arith.constant 0 : index
    %14 = vector.load %arg3[%c0_3, %c0_4] : memref<32x16xbf16, #tpu.memory_space<vmem>>, vector<32x16xbf16>
    %cst = arith.constant dense<0.000000e+00> : vector<32x128xf32>
    %15 = tpu.matmul %14, %7, %cst {dimension_numbers = #tpu.dot_dimension_numbers<[1], [0], [0], [1], [0, 0, 1, 1], [], []>} : vector<32x16xbf16>, vector<16x128xbf16>, vector<32x128xf32> -> vector<32x128xf32>
    %c0_5 = arith.constant 0 : index
    %c0_6 = arith.constant 0 : index
    %16 = vector.load %arg4[%c0_5, %c0_6] : memref<32x16xbf16, #tpu.memory_space<vmem>>, vector<32x16xbf16>
    %cst_7 = arith.constant dense<0.000000e+00> : vector<32x128xf32>
    %17 = tpu.matmul %16, %13, %cst_7 {dimension_numbers = #tpu.dot_dimension_numbers<[1], [0], [0], [1], [0, 0, 1, 1], [], []>} : vector<32x16xbf16>, vector<16x128xbf16>, vector<32x128xf32> -> vector<32x128xf32>
    %18 = tpu.concatenate %15, %17 in 0 : vector<32x128xf32>, vector<32x128xf32> -> vector<64x128xf32>
    %19 = arith.truncf %18 : vector<64x128xf32> to vector<64x128xbf16>
    %c0_8 = arith.constant 0 : index
    %c0_9 = arith.constant 0 : index
    %20 = vector.load %arg5[%c0_8, %c0_9] : memref<32x64xbf16, #tpu.memory_space<vmem>>, vector<32x64xbf16>
    %cst_10 = arith.constant dense<0.000000e+00> : vector<32x128xf32>
    %21 = tpu.matmul %20, %19, %cst_10 {dimension_numbers = #tpu.dot_dimension_numbers<[1], [0], [0], [1], [0, 0, 1, 1], [], []>} : vector<32x64xbf16>, vector<64x128xbf16>, vector<32x128xf32> -> vector<32x128xf32>
    %c0_11 = arith.constant 0 : index
    %c0_12 = arith.constant 0 : index
    %22 = vector.load %arg6[%c0_11, %c0_12] : memref<32x1xf32, #tpu.memory_space<vmem>>, vector<32x1xf32>
    %23 = vector.broadcast %22 : vector<32x1xf32> to vector<32x128xf32>
    %24 = arith.addf %21, %23 : vector<32x128xf32>
    %cst_13 = arith.constant 0.000000e+00 : f32
    %25 = vector.broadcast %cst_13 : f32 to vector<32x128xf32>
    %26 = arith.maximumf %24, %25 : vector<32x128xf32>
    %c0_14 = arith.constant 0 : index
    %c0_15 = arith.constant 0 : index
    %27 = vector.load %arg7[%c0_14, %c0_15] : memref<16x32xbf16, #tpu.memory_space<vmem>>, vector<16x32xbf16>
    %28 = arith.truncf %26 : vector<32x128xf32> to vector<32x128xbf16>
    %cst_16 = arith.constant dense<0.000000e+00> : vector<16x128xf32>
    %29 = tpu.matmul %27, %28, %cst_16 {dimension_numbers = #tpu.dot_dimension_numbers<[1], [0], [0], [1], [0, 0, 1, 1], [], []>} : vector<16x32xbf16>, vector<32x128xbf16>, vector<16x128xf32> -> vector<16x128xf32>
    %c0_17 = arith.constant 0 : index
    %c0_18 = arith.constant 0 : index
    %30 = vector.load %arg8[%c0_17, %c0_18] : memref<16x1xf32, #tpu.memory_space<vmem>>, vector<16x1xf32>
    %31 = vector.broadcast %30 : vector<16x1xf32> to vector<16x128xf32>
    %32 = arith.addf %29, %31 : vector<16x128xf32>
    %cst_19 = arith.constant 0.000000e+00 : f32
    %33 = vector.broadcast %cst_19 : f32 to vector<16x128xf32>
    %34 = arith.maximumf %32, %33 : vector<16x128xf32>
    %c0_20 = arith.constant 0 : index
    %c0_21 = arith.constant 0 : index
    %35 = vector.load %arg9[%c0_20, %c0_21] : memref<8x16xbf16, #tpu.memory_space<vmem>>, vector<8x16xbf16>
    %36 = arith.truncf %34 : vector<16x128xf32> to vector<16x128xbf16>
    %cst_22 = arith.constant dense<0.000000e+00> : vector<8x128xf32>
    %37 = tpu.matmul %35, %36, %cst_22 {dimension_numbers = #tpu.dot_dimension_numbers<[1], [0], [0], [1], [0, 0, 1, 1], [], []>} : vector<8x16xbf16>, vector<16x128xbf16>, vector<8x128xf32> -> vector<8x128xf32>
    %c0_23 = arith.constant 0 : index
    %c0_24 = arith.constant 0 : index
    %38 = vector.load %arg10[%c0_23, %c0_24] : memref<8x1xf32, #tpu.memory_space<vmem>>, vector<8x1xf32>
    %39 = vector.broadcast %38 : vector<8x1xf32> to vector<8x128xf32>
    %40 = arith.addf %37, %39 : vector<8x128xf32>
    %c0_25 = arith.constant 0 : index
    %c0_26 = arith.constant 0 : index
    %41 = vector.load %arg11[%c0_25, %c0_26] : memref<1x8xbf16, #tpu.memory_space<vmem>>, vector<1x8xbf16>
    %42 = arith.truncf %40 : vector<8x128xf32> to vector<8x128xbf16>
    %cst_27 = arith.constant dense<0.000000e+00> : vector<1x128xf32>
    %43 = tpu.matmul %41, %42, %cst_27 {dimension_numbers = #tpu.dot_dimension_numbers<[1], [0], [0], [1], [0, 0, 1, 1], [], []>} : vector<1x8xbf16>, vector<8x128xbf16>, vector<1x128xf32> -> vector<1x128xf32>
    %c0_28 = arith.constant 0 : index
    %c0_29 = arith.constant 0 : index
    %44 = vector.load %arg12[%c0_28, %c0_29] : memref<1x1xf32, #tpu.memory_space<vmem>>, vector<1x1xf32>
    %45 = vector.broadcast %44 : vector<1x1xf32> to vector<1x128xf32>
    %46 = arith.addf %43, %45 : vector<1x128xf32>
    %47 = arith.negf %46 : vector<1x128xf32>
    %48 = math.exp %47 : vector<1x128xf32>
    %cst_30 = arith.constant 1.000000e+00 : f32
    %49 = vector.broadcast %cst_30 : f32 to vector<1x128xf32>
    %50 = arith.addf %49, %48 : vector<1x128xf32>
    %51 = arith.divf %49, %50 : vector<1x128xf32>
    %c0_31 = arith.constant 0 : index
    %c0_32 = arith.constant 0 : index
    %52 = vector.load %arg13[%c0_31, %c0_32] : memref<1x128xf32, #tpu.memory_space<vmem>>, vector<1x128xf32>
    tpu.vector_store %arg13[%c0_31, %c0_32], %51 {strides = array<i32>} : memref<1x128xf32, #tpu.memory_space<vmem>>, vector<1x128xf32>,
    return
  }
  func.func @transform_0(%arg0: i32) -> (i32, i32) {
    %c0_i32 = arith.constant 0 : i32
    %c0_i32_0 = arith.constant 0 : i32
    return %c0_i32, %arg0 : i32, i32
  }
  func.func @transform_1(%arg0: i32) -> (i32, i32) {
    %c0_i32 = arith.constant 0 : i32
    %c0_i32_0 = arith.constant 0 : i32
    return %c0_i32, %arg0 : i32, i32
  }
  func.func @transform_2(%arg0: i32) -> (i32, i32) {
    %c0_i32 = arith.constant 0 : i32
    %c0_i32_0 = arith.constant 0 : i32
    %c0_i32_1 = arith.constant 0 : i32
    return %c0_i32, %c0_i32_0 : i32, i32
  }
  func.func @transform_3(%arg0: i32) -> (i32, i32) {
    %c0_i32 = arith.constant 0 : i32
    %c0_i32_0 = arith.constant 0 : i32
    %c0_i32_1 = arith.constant 0 : i32
    return %c0_i32, %c0_i32_0 : i32, i32
  }
  func.func @transform_4(%arg0: i32) -> (i32, i32) {
    %c0_i32 = arith.constant 0 : i32
    %c0_i32_0 = arith.constant 0 : i32
    %c0_i32_1 = arith.constant 0 : i32
    return %c0_i32, %c0_i32_0 : i32, i32
  }
  func.func @transform_5(%arg0: i32) -> (i32, i32) {
    %c0_i32 = arith.constant 0 : i32
    %c0_i32_0 = arith.constant 0 : i32
    %c0_i32_1 = arith.constant 0 : i32
    return %c0_i32, %c0_i32_0 : i32, i32
  }
  func.func @transform_6(%arg0: i32) -> (i32, i32) {
    %c0_i32 = arith.constant 0 : i32
    %c0_i32_0 = arith.constant 0 : i32
    %c0_i32_1 = arith.constant 0 : i32
    return %c0_i32, %c0_i32_0 : i32, i32
  }
  func.func @transform_7(%arg0: i32) -> (i32, i32) {
    %c0_i32 = arith.constant 0 : i32
    %c0_i32_0 = arith.constant 0 : i32
    %c0_i32_1 = arith.constant 0 : i32
    return %c0_i32, %c0_i32_0 : i32, i32
  }
  func.func @transform_8(%arg0: i32) -> (i32, i32) {
    %c0_i32 = arith.constant 0 : i32
    %c0_i32_0 = arith.constant 0 : i32
    %c0_i32_1 = arith.constant 0 : i32
    return %c0_i32, %c0_i32_0 : i32, i32
  }
  func.func @transform_9(%arg0: i32) -> (i32, i32) {
    %c0_i32 = arith.constant 0 : i32
    %c0_i32_0 = arith.constant 0 : i32
    %c0_i32_1 = arith.constant 0 : i32
    return %c0_i32, %c0_i32_0 : i32, i32
  }
  func.func @transform_10(%arg0: i32) -> (i32, i32) {
    %c0_i32 = arith.constant 0 : i32
    %c0_i32_0 = arith.constant 0 : i32
    %c0_i32_1 = arith.constant 0 : i32
    return %c0_i32, %c0_i32_0 : i32, i32
  }
  func.func @transform_11(%arg0: i32) -> (i32, i32) {
    %c0_i32 = arith.constant 0 : i32
    %c0_i32_0 = arith.constant 0 : i32
    %c0_i32_1 = arith.constant 0 : i32
    return %c0_i32, %c0_i32_0 : i32, i32
  }
  func.func @transform_12(%arg0: i32) -> (i32, i32) {
    %c0_i32 = arith.constant 0 : i32
    %c0_i32_0 = arith.constant 0 : i32
    return %c0_i32, %arg0 : i32, i32
  }
}

</mosaic_0001>

<llo_original>
// kernel: tpu_custom_call.1
$region0: #{tpu_custom_call.1}
  #allocation0 [shape = 'u32[]', space=smem, size = 0x4, offset = 0x4, fixed_abs, tag = 'smem constant byte address 0x4 - core index']
  #allocation1 [shape = 'u32[72,128]{1,0:T(1,128)}', space=vmem, size = 0x9000, scoped, tag = 'internal scratch']
  #allocation2 [shape = 'f32[1,1]{1,0:T(1,128)S(1)}', space=vmem, size = 0x200, scoped, tag = 'scoped memory for tpu_custom_call.1']
  %s0 = inlined_call_operand.vmem [shape: s32[1,128], index: 0, kind: input, shape index: {}]
  %s1 = inlined_call_operand.vmem [shape: s32[1,128], index: 1, kind: input, shape index: {}]
  %s2 = inlined_call_operand.vmem [shape: bf16[32,16], index: 2, kind: input, shape index: {}]
  %s3 = inlined_call_operand.vmem [shape: bf16[32,16], index: 3, kind: input, shape index: {}]
  %s4 = inlined_call_operand.vmem [shape: bf16[32,64], index: 4, kind: input, shape index: {}]
  %s5 = inlined_call_operand.vmem [shape: f32[32,1], index: 5, kind: input, shape index: {}]
  %s6 = inlined_call_operand.vmem [shape: bf16[16,32], index: 6, kind: input, shape index: {}]
  %s7 = inlined_call_operand.vmem [shape: f32[16,1], index: 7, kind: input, shape index: {}]
  %s8 = inlined_call_operand.vmem [shape: bf16[8,16], index: 8, kind: input, shape index: {}]
  %s9 = inlined_call_operand.vmem [shape: f32[8,1], index: 9, kind: input, shape index: {}]
  %s10 = inlined_call_operand.vmem [shape: bf16[1,8], index: 10, kind: input, shape index: {}]
  %s11 = inlined_call_operand.<no memory space> [shape: f32[1,1], index: 11, kind: input, shape index: {}]
  %s12 = inlined_call_operand.hbm [shape: f32[1,128], index: 12, kind: output, shape index: {}]
  %s13 = sld [smem:[#allocation0]]
  $region58: #{tpu_custom_call.1} parent=0
    _
  %s15 = ssub.s32 1, %s13
  %s16 = scalar_select 0, %s15, %s13
  %v17 = vstv %s11
  %18 = vst [vmem:[#allocation2] sm:$0x1] %v17
  $region1: #{tpu_custom_call.1} parent=0
    #allocation3 [shape = 'u8[512]{0}', space=vmem, size = 0x400, scoped, tag = 'output window, operand 0, single buffered']
    #allocation4 [shape = 's32[1]{0}', space=sflag, size = 0x4, scoped, tag = 'scoped memory for tpu_custom_call.1']
    %19 = vsyncpa [#allocation4], 0
    // Predicated region
    $region2: #{tpu_custom_call.1} parent=1 // pred_check
      _
    $region3: #{tpu_custom_call.1} parent=1 // pred_check_branch
      %21 = sbr.rel (0) target = $region5
    $region4: #{tpu_custom_call.1} parent=1 // pred_region
      _
    $region5: #{tpu_custom_call.1} parent=1 // pred_fallthru
      _
    // Predicated region
    $region6: #{tpu_custom_call.1} parent=1 // pred_check
      _
    $region7: #{tpu_custom_call.1} parent=1 // pred_check_branch
      %23 = sbr.rel (0) target = $region9
    $region8: #{tpu_custom_call.1} parent=1 // pred_region
      _
    $region9: #{tpu_custom_call.1} parent=1 // pred_fallthru
      _
    // Predicated region
    $region10: #{tpu_custom_call.1} parent=1 // pred_check
      _
    $region11: #{tpu_custom_call.1} parent=1 // pred_check_branch
      %25 = sbr.rel (0) target = $region13
    $region12: #{tpu_custom_call.1} parent=1 // pred_region
      _
    $region13: #{tpu_custom_call.1} parent=1 // pred_fallthru
      _
    // Predicated region
    $region14: #{tpu_custom_call.1} parent=1 // pred_check
      _
    $region15: #{tpu_custom_call.1} parent=1 // pred_check_branch
      %27 = sbr.rel (0) target = $region17
    $region16: #{tpu_custom_call.1} parent=1 // pred_region
      _
    $region17: #{tpu_custom_call.1} parent=1 // pred_fallthru
      _
    // Predicated region
    $region18: #{tpu_custom_call.1} parent=1 // pred_check
      _
    $region19: #{tpu_custom_call.1} parent=1 // pred_check_branch
      %29 = sbr.rel (0) target = $region21
    $region20: #{tpu_custom_call.1} parent=1 // pred_region
      _
    $region21: #{tpu_custom_call.1} parent=1 // pred_fallthru
      _
    // Predicated region
    $region22: #{tpu_custom_call.1} parent=1 // pred_check
      _
    $region23: #{tpu_custom_call.1} parent=1 // pred_check_branch
      %31 = sbr.rel (0) target = $region25
    $region24: #{tpu_custom_call.1} parent=1 // pred_region
      _
    $region25: #{tpu_custom_call.1} parent=1 // pred_fallthru
      _
    // Predicated region
    $region26: #{tpu_custom_call.1} parent=1 // pred_check
      _
    $region27: #{tpu_custom_call.1} parent=1 // pred_check_branch
      %33 = sbr.rel (0) target = $region29
    $region28: #{tpu_custom_call.1} parent=1 // pred_region
      _
    $region29: #{tpu_custom_call.1} parent=1 // pred_fallthru
      _
    // Predicated region
    $region30: #{tpu_custom_call.1} parent=1 // pred_check
      _
    $region31: #{tpu_custom_call.1} parent=1 // pred_check_branch
      %35 = sbr.rel (0) target = $region33
    $region32: #{tpu_custom_call.1} parent=1 // pred_region
      _
    $region33: #{tpu_custom_call.1} parent=1 // pred_fallthru
      _
    // Predicated region
    $region34: #{tpu_custom_call.1} parent=1 // pred_check
      _
    $region35: #{tpu_custom_call.1} parent=1 // pred_check_branch
      %37 = sbr.rel (0) target = $region37
    $region36: #{tpu_custom_call.1} parent=1 // pred_region
      _
    $region37: #{tpu_custom_call.1} parent=1 // pred_fallthru
      _
    // Predicated region
    $region38: #{tpu_custom_call.1} parent=1 // pred_check
      _
    $region39: #{tpu_custom_call.1} parent=1 // pred_check_branch
      %39 = sbr.rel (0) target = $region41
    $region40: #{tpu_custom_call.1} parent=1 // pred_region
      _
    $region41: #{tpu_custom_call.1} parent=1 // pred_fallthru
      _
    // Predicated region
    $region42: #{tpu_custom_call.1} parent=1 // pred_check
      _
    $region43: #{tpu_custom_call.1} parent=1 // pred_check_branch
      %41 = sbr.rel (0) target = $region45
    $region44: #{tpu_custom_call.1} parent=1 // pred_region
      _
    $region45: #{tpu_custom_call.1} parent=1 // pred_fallthru
      _
    // Predicated region
    $region46: #{tpu_custom_call.1} parent=1 // pred_check
      _
    $region47: #{tpu_custom_call.1} parent=1 // pred_check_branch
      %43 = sbr.rel (0) target = $region49
    $region48: #{tpu_custom_call.1} parent=1 // pred_region
      _
    $region49: #{tpu_custom_call.1} parent=1 // pred_fallthru
      _
    %v45 = vld [vmem:[%s0] sm:$0x1]
    %v46 = vld [vmem:[%s1] sm:$0x1]
    %v47 = vlaneseq
    %v48 = vshrl.u32 %v47, 7
    %v49 = vadd.s32 %v48, 8
    %v50 = vperm.slane %v45, 0
    %vm51 = vcmp.eq.s32.totalorder %v48, %v50
    %vm52 = vcmp.eq.s32.totalorder %v49, %v50
    %v53 = vsel %vm51, 1, 0
    %v54 = vsel %vm52, 1, 0
    %v55 = vcvt.s32.f32 %v53
    %v56 = vcvt.s32.f32 %v54
    %v57 = vpack.c.bf16 %v56, %v55
    %v58 = vperm.slane %v46, 0
    %vm59 = vcmp.eq.s32.totalorder %v48, %v58
    %vm60 = vcmp.eq.s32.totalorder %v49, %v58
    %v61 = vsel %vm59, 1, 0
    %v62 = vsel %vm60, 1, 0
    %v63 = vcvt.s32.f32 %v61
    %v64 = vcvt.s32.f32 %v62
    %v65 = vpack.c.bf16 %v64, %v63
    %v66 = vld [vmem:[%s2] sm:$0xf]
    %v67 = vld [vmem:[%s2 + $0x4] sm:$0xf]
    %v68 = vld [vmem:[%s2 + $0x8] sm:$0xf]
    %v69 = vld [vmem:[%s2 + $0xc] sm:$0xf]
    %v74 = vunpack.c.l.b16 %v66
    %v75 = vunpack.c.l.b16 %v67
    %v76 = vunpack.c.l.b16 %v68
    %v77 = vunpack.c.l.b16 %v69
    %v78 = vpack.c.b16 %v75, %v74
    %v79 = vpack.c.b16 %v77, %v76
    %vm80 = vcmask 130048
    %v82 = vsel %vm80, %v78, 0
    %v85 = vsel %vm80, %v79, 0
    %87 = vmatpush.bf16.msra.mxu0 0
    %88 = vmatpush.bf16.msra.mxu0 0
    %89 = vmatpush.bf16.msra.mxu0 0
    %90 = vmatpush.bf16.msra.mxu0 0
    %91 = vmatpush.bf16.msra.mxu0 0
    %92 = vmatpush.bf16.msra.mxu0 0
    %93 = vmatpush.bf16.msra.mxu0 0
    %94 = vmatpush.bf16.msra.mxu0 %v57
    %95 = vmatmul.bf16.gmra.mxu0 %v82
    %v96 = vpop.f32.mrf.mxu0
    %v97 = vadd.f32 0.0, %v96
    %v98 = vpop.f32.mrf.mxu0
    %v99 = vadd.f32 0.0, %v98
    %100 = vmatmul.bf16.gmra.mxu0 %v85
    %v101 = vpop.f32.mrf.mxu0
    %v102 = vadd.f32 0.0, %v101
    %v103 = vpop.f32.mrf.mxu0
    %v104 = vadd.f32 0.0, %v103
    %105 = vdwg.mxu0
    %v106 = vld [vmem:[%s3] sm:$0xf]
    %v107 = vld [vmem:[%s3 + $0x4] sm:$0xf]
    %v108 = vld [vmem:[%s3 + $0x8] sm:$0xf]
    %v109 = vld [vmem:[%s3 + $0xc] sm:$0xf]
    %v114 = vunpack.c.l.b16 %v106
    %v115 = vunpack.c.l.b16 %v107
    %v116 = vunpack.c.l.b16 %v108
    %v117 = vunpack.c.l.b16 %v109
    %v118 = vpack.c.b16 %v115, %v114
    %v119 = vpack.c.b16 %v117, %v116
    %v121 = vsel %vm80, %v118, 0
    %v124 = vsel %vm80, %v119, 0
    %126 = vmatpush.bf16.msra.mxu0 0
    %127 = vmatpush.bf16.msra.mxu0 0
    %128 = vmatpush.bf16.msra.mxu0 0
    %129 = vmatpush.bf16.msra.mxu0 0
    %130 = vmatpush.bf16.msra.mxu0 0
    %131 = vmatpush.bf16.msra.mxu0 0
    %132 = vmatpush.bf16.msra.mxu0 0
    %133 = vmatpush.bf16.msra.mxu0 %v65
    %134 = vmatmul.bf16.gmra.mxu0 %v121
    %v135 = vpop.f32.mrf.mxu0
    %v136 = vadd.f32 0.0, %v135
    %v137 = vpop.f32.mrf.mxu0
    %v138 = vadd.f32 0.0, %v137
    %139 = vmatmul.bf16.gmra.mxu0 %v124
    %v140 = vpop.f32.mrf.mxu0
    %v141 = vadd.f32 0.0, %v140
    %v142 = vpop.f32.mrf.mxu0
    %v143 = vadd.f32 0.0, %v142
    %144 = vdwg.mxu0
    %v145 = vpack.c.bf16 %v99, %v97
    %v146 = vpack.c.bf16 %v104, %v102
    %v147 = vpack.c.bf16 %v138, %v136
    %v148 = vpack.c.bf16 %v143, %v141
    %v149 = vld [vmem:[%s4] sm:$0xf]
    %v150 = vld [vmem:[%s4 + $0x4] sm:$0xf]
    %v151 = vld [vmem:[%s4 + $0x8] sm:$0xf]
    %v152 = vld [vmem:[%s4 + $0xc] sm:$0xf]
    %v153 = vld [vmem:[%s5] sm:$0xff]
    %v154 = vld [vmem:[%s5 + $0x8] sm:$0xff]
    %v155 = vld [vmem:[%s5 + $0x10] sm:$0xff]
    %v156 = vld [vmem:[%s5 + $0x18] sm:$0xff]
    %158 = vset.pattern.permute.xlu0 0
    %159 = vperm.xlu0 %158, %v153
    %v160 = vpop.permute.xlu0 %159
    %163 = vset.pattern.permute.xlu0 0
    %164 = vperm.xlu0 %163, %v154
    %v165 = vpop.permute.xlu0 %164
    %168 = vset.pattern.permute.xlu0 0
    %169 = vperm.xlu0 %168, %v155
    %v170 = vpop.permute.xlu0 %169
    %173 = vset.pattern.permute.xlu0 0
    %174 = vperm.xlu0 %173, %v156
    %v175 = vpop.permute.xlu0 %174
    %v181 = vunpack.c.l.b16 %v149
    %v182 = vunpack.c.l.b16 %v150
    %v183 = vunpack.c.l.b16 %v151
    %v184 = vunpack.c.l.b16 %v152
    %v185 = vpack.c.b16 %v182, %v181
    %v186 = vpack.c.b16 %v184, %v183
    %vm187 = vcmask 523264
    %v189 = vsel %vm187, %v185, 0
    %v192 = vsel %vm187, %v186, 0
    %194 = vmatpush.bf16.msra.mxu0 0
    %195 = vmatpush.bf16.msra.mxu0 0
    %196 = vmatpush.bf16.msra.mxu0 0
    %197 = vmatpush.bf16.msra.mxu0 0
    %198 = vmatpush.bf16.msra.mxu0 %v148
    %199 = vmatpush.bf16.msra.mxu0 %v147
    %200 = vmatpush.bf16.msra.mxu0 %v146
    %201 = vmatpush.bf16.msra.mxu0 %v145
    %202 = vmatmul.bf16.gmra.mxu0 %v189
    %v203 = vpop.f32.mrf.mxu0
    %v204 = vadd.f32 %v160, %v203
    %v205 = vpop.f32.mrf.mxu0
    %v206 = vadd.f32 %v165, %v205
    %207 = vmatmul.bf16.gmra.mxu0 %v192
    %v208 = vpop.f32.mrf.mxu0
    %v209 = vadd.f32 %v170, %v208
    %v210 = vpop.f32.mrf.mxu0
    %v211 = vadd.f32 %v175, %v210
    %212 = vdwg.mxu0
    %v213 = vmax.f32 %v204, 0.0
    %v214 = vmax.f32 %v206, 0.0
    %v215 = vmax.f32 %v209, 0.0
    %v216 = vmax.f32 %v211, 0.0
    %v217 = vld [vmem:[%s6] sm:$0xf]
    %v218 = vld [vmem:[%s6 + $0x4] sm:$0xf]
    %v219 = vpack.c.bf16 %v214, %v213
    %v220 = vpack.c.bf16 %v216, %v215
    %v221 = vld [vmem:[%s7] sm:$0xff]
    %v222 = vld [vmem:[%s7 + $0x8] sm:$0xff]
    %224 = vset.pattern.permute.xlu0 0
    %225 = vperm.xlu0 %224, %v221
    %v226 = vpop.permute.xlu0 %225
    %229 = vset.pattern.permute.xlu0 0
    %230 = vperm.xlu0 %229, %v222
    %v231 = vpop.permute.xlu0 %230
    %v235 = vunpack.c.l.b16 %v217
    %v236 = vunpack.c.l.b16 %v218
    %v237 = vpack.c.b16 %v236, %v235
    %vm238 = vcmask 261120
    %v240 = vsel %vm238, %v237, 0
    %242 = vmatpush.bf16.msra.mxu0 0
    %243 = vmatpush.bf16.msra.mxu0 0
    %244 = vmatpush.bf16.msra.mxu0 0
    %245 = vmatpush.bf16.msra.mxu0 0
    %246 = vmatpush.bf16.msra.mxu0 0
    %247 = vmatpush.bf16.msra.mxu0 0
    %248 = vmatpush.bf16.msra.mxu0 %v220
    %249 = vmatpush.bf16.msra.mxu0 %v219
    %250 = vmatmul.bf16.gmra.mxu0 %v240
    %v251 = vpop.f32.mrf.mxu0
    %v252 = vadd.f32 %v226, %v251
    %v253 = vpop.f32.mrf.mxu0
    %v254 = vadd.f32 %v231, %v253
    %255 = vdwg.mxu0
    %v256 = vmax.f32 %v252, 0.0
    %v257 = vmax.f32 %v254, 0.0
    %v258 = vld [vmem:[%s8] sm:$0xf]
    %v259 = vpack.c.bf16 %v257, %v256
    %v260 = vld [vmem:[%s9] sm:$0xff]
    %262 = vset.pattern.permute.xlu0 0
    %263 = vperm.xlu0 %262, %v260
    %v264 = vpop.permute.xlu0 %263
    %v267 = vsel %vm80, %v258, 0
    %269 = vmatpush.bf16.msra.mxu0 0
    %270 = vmatpush.bf16.msra.mxu0 0
    %271 = vmatpush.bf16.msra.mxu0 0
    %272 = vmatpush.bf16.msra.mxu0 0
    %273 = vmatpush.bf16.msra.mxu0 0
    %274 = vmatpush.bf16.msra.mxu0 0
    %275 = vmatpush.bf16.msra.mxu0 0
    %276 = vmatpush.bf16.msra.mxu0 %v259
    %277 = vmatmul.bf16.gmra.mxu0 %v267
    %v278 = vpop.f32.mrf.mxu0
    %v279 = vadd.f32 %v264, %v278
    %v280 = vpop.f32.mrf.mxu0
    %281 = vdwg.mxu0
    %v282 = vld [vmem:[%s10] sm:$0x1]
    %v283 = vpack.c.bf16 %v279, %v279
    %v284 = vld [vmem:[#allocation2] sm:$0x1]
    %286 = vset.pattern.permute.xlu0 0
    %287 = vperm.xlu0 %286, %v284
    %v288 = vpop.permute.xlu0 %287
    %v290 = vperm.slane %v288, 0
    %vm291 = vcmask 64512
    %v293 = vsel %vm291, %v282, 0
    %vm295 = vcmask 1043456
    %v297 = vsel %vm295, %v283, 0
    %299 = vmatpush.bf16.msra.mxu0 0
    %300 = vmatpush.bf16.msra.mxu0 0
    %301 = vmatpush.bf16.msra.mxu0 0
    %302 = vmatpush.bf16.msra.mxu0 0
    %303 = vmatpush.bf16.msra.mxu0 0
    %304 = vmatpush.bf16.msra.mxu0 0
    %305 = vmatpush.bf16.msra.mxu0 0
    %306 = vmatpush.bf16.msra.mxu0 %v297
    %307 = vmatmul.bf16.gmra.mxu0 %v293
    %v308 = vpop.f32.mrf.mxu0
    %v309 = vadd.f32 %v290, %v308
    %v310 = vpop.f32.mrf.mxu0
    %311 = vdwg.mxu0
    %v312 = vxor.u32 %v309, 2147483648
    %v313 = vmul.f32 %v312, 1.442695
    %v314 = vpow.pop %v313
    %v315 = vadd.f32 %v314, 1.0
    %v316 = vrcp.pop %v315
    %v317 = vmul.f32 %v315, %v316
    %v318 = vsub.f32 1.0, %v317
    %v319 = vmul.f32 %v316, %v318
    %v320 = vadd.f32 %v316, %v319
    %vm321 = vweird.f32 %v315
    %vm322 = vweird.f32 %v316
    %vm323 = vmor %vm321, %vm322
    %v324 = vsel %vm323, %v316, %v320
    %v325 = vand.u32 2147483647, %v315
    %vm326 = vcmp.eq.f32.partialorder %v325, 8.507059e+37
    %v327 = vand.u32 %v315, 2147483648
    %v328 = vor.u32 1.1754944e-38, %v327
    %v329 = vsel %vm326, %v328, %v324
    %v330 = vmul.f32 1.0, %v329
    %331 = vst [vmem:[#allocation3] sm:$0x1] %v330
    // Predicated region
    $region50: #{tpu_custom_call.1} parent=1 // pred_check
      _
    $region51: #{tpu_custom_call.1} parent=1 // pred_check_branch
      %333 = sbr.rel (0) target = $region53
    $region52: #{tpu_custom_call.1} parent=1 // pred_region
      %335 = vsyncadd [#allocation4], 0
      %s337 = sshll.u32 [#allocation3], 4
      %s338 = int_to_ptr.vmem [resolvable:$true] %s337
      %s339 = sshll.u32 %s12, 4
      %s340 = int_to_ptr.hbm [resolvable:$true] %s339
      %342 = dma.vmem_to_hbm [thread:$0]  %s338, 16, %s340, [#allocation4]
    $region53: #{tpu_custom_call.1} parent=1 // pred_fallthru
      _
    // Predicated region
    $region54: #{tpu_custom_call.1} parent=1 // pred_check
      _
    $region55: #{tpu_custom_call.1} parent=1 // pred_check_branch
      %344 = sbr.rel (0) target = $region57
    $region56: #{tpu_custom_call.1} parent=1 // pred_region
      %346 = dma.done [#allocation4], 16
    $region57: #{tpu_custom_call.1} parent=1 // pred_fallthru
      _
    %347 = vsyncpa [#allocation4], 1

</llo_original>
